<compile_context>
chip_gen: v5e
topology: v5e:2x2
jax: 0.10.0
libtpu: 0.0.40
codegen_flags: <defaults>
</compile_context>

<pallas_src>
import jax
import jax.numpy as jnp
from jax import lax
from jax.experimental import pallas as pl
from jax.experimental.pallas import tpu as pltpu

# ---- synthetic episode configuration (args.num_shots_support etc.) ----------
NUM_TASKS = 8                   # tasks batched into one pallas_call
NUM_CLASSES = 4                 # unique labels per task
NUM_SHOTS = 2                   # args.num_shots_support
NUM_SUPPORT = NUM_CLASSES * NUM_SHOTS            # 8
NUM_QUERY = 8
N_TOTAL = NUM_SUPPORT + NUM_QUERY                # 16
HIDDEN = 32                     # bert_config.hidden_size (small synthetic)
LINEAR_SIZE = 128               # args.bert_linear_size
C_PAD = 8                       # class dim padded to the f32 sublane tile
COS_EPS = 1e-8                  # torch.nn.CosineSimilarity default eps
EPS_SQ = COS_EPS * COS_EPS


def protonet_kernel(labels_ref, embs_ref, w_ref, b_ref, logits_ref):
    """All NUM_TASKS episodes in one invocation (no per-task grid overhead).

    labels_ref : [T, S]        int32  support labels
    embs_ref   : [T*N, H]      bf16   pooled BERT embeddings, task-major
    w_ref      : [H, D]        bf16   linear weight (stored transposed)
    b_ref      : [1, D]        f32    linear bias
    logits_ref : [T, Q, C_PAD] f32    cosine-similarity logits
    """
    # -- self.linear: one batched [T*N, H] @ [H, D] MXU matmul, f32 acc --------
    # (nn.Dropout is identity in eval mode.)
    # TODO(synk): training-mode nn.Dropout (hidden_dropout_prob) not modeled.
    feats = jnp.dot(embs_ref[...], w_ref[...],
                    preferred_element_type=jnp.float32) + b_ref[...]      # [T*N, D]
    feats = feats.reshape(NUM_TASKS, N_TOTAL, LINEAR_SIZE)                # [T, N, D]
    support = feats[:, :NUM_SUPPORT, :]                                   # [T, S, D]
    query = feats[:, NUM_SUPPORT:, :]                                     # [T, Q, D]

    # -- one-hot support labels: single vectorized compare vs class iota ------
    cls_iota = lax.broadcasted_iota(
        jnp.int32, (NUM_TASKS, NUM_SUPPORT, C_PAD), 2)
    onehot = (labels_ref[...][:, :, None] == cls_iota).astype(jnp.float32)  # [T,S,C]

    # -- PrototypeBuildingNetwork: per-class SUM of support features ----------
    # The 1/count mean scaling is dropped: cosine similarity normalizes each
    # prototype row, so the uniform per-class scale cancels exactly.
    protos = jnp.einsum('tsc,tsd->tcd', onehot, support,
                        preferred_element_type=jnp.float32)               # [T, C, D]

    # -- nn.CosineSimilarity(dim=-1): normalize both sides with rsqrt (EUP) ---
    inv_q = lax.rsqrt(jnp.maximum(
        jnp.sum(query * query, axis=-1, keepdims=True), EPS_SQ))          # [T, Q, 1]
    inv_p = lax.rsqrt(jnp.maximum(
        jnp.sum(protos * protos, axis=-1, keepdims=True), EPS_SQ))        # [T, C, 1]
    logits_ref[...] = jnp.einsum('tqd,tcd->tqc', query * inv_q, protos * inv_p,
                                 preferred_element_type=jnp.float32)      # [T, Q, C]


def protonet_forward(embs, weight, bias, support_labels, query_labels):
    """Batched mirror of forward(): returns (summed loss, per-task acc, logits)."""
    # bf16 operands for the MXU projection; accumulation stays f32 in-kernel.
    embs_flat_bf = embs.reshape(NUM_TASKS * N_TOTAL, HIDDEN).astype(jnp.bfloat16)
    w_bf = weight.astype(jnp.bfloat16)

    # Single fat step: whole problem (~70 KB) lives in VMEM; no grid, no
    # per-step pipeline overhead.
    # TODO(synk): at real BERT sizes (HIDDEN=768, hundreds of tasks) reintroduce
    # a task-blocked grid and set vmem_limit_bytes (v7x has only 64 MiB VMEM).
    vmem = pltpu.MemorySpace.VMEM
    logits_padded = pl.pallas_call(
        protonet_kernel,
        out_shape=jax.ShapeDtypeStruct((NUM_TASKS, NUM_QUERY, C_PAD), jnp.float32),
        in_specs=[
            pl.BlockSpec(memory_space=vmem),   # support labels [T, S] int32
            pl.BlockSpec(memory_space=vmem),   # embs           [T*N, H] bf16
            pl.BlockSpec(memory_space=vmem),   # weight         [H, D] bf16
            pl.BlockSpec(memory_space=vmem),   # bias           [1, D] f32
        ],
        out_specs=pl.BlockSpec(memory_space=vmem),
    )(support_labels, embs_flat_bf, w_bf, bias)

    logits = logits_padded[:, :, :NUM_CLASSES]                            # [T, Q, C]

    # CrossEntropyMixin.loss (mean over queries) summed over tasks, as forward()
    logp = jax.nn.log_softmax(logits, axis=-1)
    nll = -jnp.take_along_axis(logp, query_labels[..., None], axis=-1)[..., 0]
    total_loss = jnp.sum(jnp.mean(nll, axis=-1))
    # ClassificationAccMixin.accuracy_fn, stacked per task
    query_acc = jnp.mean(
        (jnp.argmax(logits, axis=-1) == query_labels).astype(jnp.float32), axis=-1)
    return total_loss, query_acc, logits


def reference_logits(embs, weight, bias, support_labels):
    """Pure-JAX reference of the kernel math (same bf16 rounding of operands)."""
    feats = jnp.einsum("tnh,hd->tnd",
                       embs.astype(jnp.bfloat16).astype(jnp.float32),
                       weight.astype(jnp.bfloat16).astype(jnp.float32)) + bias
    support, query = feats[:, :NUM_SUPPORT], feats[:, NUM_SUPPORT:]
    onehot = jax.nn.one_hot(support_labels, NUM_CLASSES, dtype=jnp.float32)
    counts = jnp.maximum(jnp.sum(onehot, axis=1), 1.0)                    # [T, C]
    protos = jnp.einsum("tsc,tsd->tcd", onehot, support) / counts[..., None]
    qn = query / jnp.maximum(jnp.linalg.norm(query, axis=-1, keepdims=True), COS_EPS)
    pn = protos / jnp.maximum(jnp.linalg.norm(protos, axis=-1, keepdims=True), COS_EPS)
    return jnp.einsum("tqd,tcd->tqc", qn, pn)


if __name__ == "__main__":
    key = jax.random.PRNGKey(0)
    k_emb, k_w, k_b, k_slab, k_qlab = jax.random.split(key, 5)

    # Pooled BERT embeddings for all episodes (support first, then query).
    # TODO(synk): HuggingfaceBertModel encoder (pretrained checkpoint) is not
    # reproduced; its pooled outputs are the synthetic input here.
    embs = jax.random.normal(k_emb, (NUM_TASKS, N_TOTAL, HIDDEN), dtype=jnp.float32)

    # nn.Linear(HIDDEN, LINEAR_SIZE) default init, stored transposed as [H, D].
    bound = 1.0 / (HIDDEN ** 0.5)
    weight = jax.random.uniform(k_w, (HIDDEN, LINEAR_SIZE),
                                minval=-bound, maxval=bound, dtype=jnp.float32)
    bias = jax.random.uniform(k_b, (1, LINEAR_SIZE),
                              minval=-bound, maxval=bound, dtype=jnp.float32)

    # Balanced support labels (every class appears NUM_SHOTS times), permuted
    # per task; random query labels.
    base = jnp.repeat(jnp.arange(NUM_CLASSES, dtype=jnp.int32), NUM_SHOTS)
    slab_keys = jax.random.split(k_slab, NUM_TASKS)
    support_labels = jnp.stack(
        [jax.random.permutation(k, base) for k in slab_keys]).astype(jnp.int32)
    query_labels = jax.random.randint(
        k_qlab, (NUM_TASKS, NUM_QUERY), 0, NUM_CLASSES, dtype=jnp.int32)

    loss, query_acc, logits = protonet_forward(
        embs, weight, bias, support_labels, query_labels)
    jax.block_until_ready((loss, query_acc, logits))

    ref = reference_logits(embs, weight, bias, support_labels)
    jax.block_until_ready(ref)

    assert logits.shape == (NUM_TASKS, NUM_QUERY, NUM_CLASSES)
    assert query_acc.shape == (NUM_TASKS,)
    assert bool(jnp.all(jnp.isfinite(logits)))
    assert bool(jnp.isfinite(loss))
    assert bool(jnp.all(jnp.abs(logits) <= 1.0 + 1e-3))
    assert bool(jnp.allclose(logits, ref, atol=5e-3, rtol=5e-3))
    print("KERNEL_OK")
</pallas_src>

<mosaic_0001>
module attributes {stable_mosaic.version = 11 : i64} {
  func.func @protonet_kernel(%arg0: memref<8x8xi32, #tpu.memory_space<vmem>>, %arg1: memref<128x32xbf16, #tpu.memory_space<vmem>>, %arg2: memref<32x128xbf16, #tpu.memory_space<vmem>>, %arg3: memref<1x128xf32, #tpu.memory_space<vmem>>, %arg4: memref<8x8x8xf32, #tpu.memory_space<vmem>>) attributes {dimension_semantics = [], scalar_prefetch = 0 : i64, scratch_operands = 0 : i64, tpu.core_type = #tpu.core_type<tc>} {
    %c0 = arith.constant 0 : index
    %c0_0 = arith.constant 0 : index
    %0 = vector.load %arg1[%c0, %c0_0] : memref<128x32xbf16, #tpu.memory_space<vmem>>, vector<128x32xbf16>
    %c0_1 = arith.constant 0 : index
    %c0_2 = arith.constant 0 : index
    %1 = vector.load %arg2[%c0_1, %c0_2] : memref<32x128xbf16, #tpu.memory_space<vmem>>, vector<32x128xbf16>
    %cst = arith.constant dense<0.000000e+00> : vector<128x128xf32>
    %2 = tpu.matmul %0, %1, %cst {dimension_numbers = #tpu.dot_dimension_numbers<[1], [0], [0], [1], [0, 0, 1, 1], [], []>} : vector<128x32xbf16>, vector<32x128xbf16>, vector<128x128xf32> -> vector<128x128xf32>
    %c0_3 = arith.constant 0 : index
    %c0_4 = arith.constant 0 : index
    %3 = vector.load %arg3[%c0_3, %c0_4] : memref<1x128xf32, #tpu.memory_space<vmem>>, vector<1x128xf32>
    %4 = vector.broadcast %3 : vector<1x128xf32> to vector<128x128xf32>
    %5 = arith.addf %2, %4 : vector<128x128xf32>
    %6 = vector.shape_cast %5 : vector<128x128xf32> to vector<8x16x128xf32>
    %7 = vector.extract_strided_slice %6 {offsets = [0, 0, 0], sizes = [8, 8, 128], strides = [1, 1, 1]} : vector<8x16x128xf32> to vector<8x8x128xf32>
    %8 = vector.extract_strided_slice %6 {offsets = [0, 8, 0], sizes = [8, 8, 128], strides = [1, 1, 1]} : vector<8x16x128xf32> to vector<8x8x128xf32>
    %9 = tpu.iota {dimensions = array<i32: 2>} : vector<8x8x8xi32>
    %c0_5 = arith.constant 0 : index
    %c0_6 = arith.constant 0 : index
    %10 = vector.load %arg0[%c0_5, %c0_6] : memref<8x8xi32, #tpu.memory_space<vmem>>, vector<8x8xi32>
    %11 = vector.shape_cast %10 : vector<8x8xi32> to vector<8x8x1xi32>
    %12 = vector.broadcast %11 : vector<8x8x1xi32> to vector<8x8x8xi32>
    %13 = arith.cmpi eq, %12, %9 : vector<8x8x8xi32>
    %14 = arith.extui %13 : vector<8x8x8xi1> to vector<8x8x8xi32>
    %15 = arith.sitofp %14 : vector<8x8x8xi32> to vector<8x8x8xf32>
    "tpu.trace_start"() <{level = 10 : i32, message = "tsc,tsd->tcd"}> : () -> ()
    %cst_7 = arith.constant dense<0.000000e+00> : vector<8x8x128xf32>
    %16 = tpu.matmul %15, %7, %cst_7 {dimension_numbers = #tpu.dot_dimension_numbers<[1], [1], [2], [2], [0, 0, 0, 2, 1, 2], [0], [0]>} : vector<8x8x8xf32>, vector<8x8x128xf32>, vector<8x8x128xf32> -> vector<8x8x128xf32>
    "tpu.trace_stop"() : () -> ()
    %17 = arith.mulf %8, %8 : vector<8x8x128xf32>
    %cst_8 = arith.constant dense<0.000000e+00> : vector<8x8xf32>
    %18 = vector.multi_reduction <add>, %17, %cst_8 [2] : vector<8x8x128xf32> to vector<8x8xf32>
    %19 = vector.shape_cast %18 : vector<8x8xf32> to vector<8x8x1xf32>
    %cst_9 = arith.constant 1.000000e-16 : f32
    %20 = vector.broadcast %cst_9 : f32 to vector<8x8x1xf32>
    %21 = arith.maximumf %19, %20 : vector<8x8x1xf32>
    %22 = math.rsqrt %21 : vector<8x8x1xf32>
    %23 = arith.mulf %16, %16 : vector<8x8x128xf32>
    %cst_10 = arith.constant dense<0.000000e+00> : vector<8x8xf32>
    %24 = vector.multi_reduction <add>, %23, %cst_10 [2] : vector<8x8x128xf32> to vector<8x8xf32>
    %25 = vector.shape_cast %24 : vector<8x8xf32> to vector<8x8x1xf32>
    %cst_11 = arith.constant 1.000000e-16 : f32
    %26 = vector.broadcast %cst_11 : f32 to vector<8x8x1xf32>
    %27 = arith.maximumf %25, %26 : vector<8x8x1xf32>
    %28 = math.rsqrt %27 : vector<8x8x1xf32>
    %29 = vector.broadcast %22 : vector<8x8x1xf32> to vector<8x8x128xf32>
    %30 = arith.mulf %8, %29 : vector<8x8x128xf32>
    %31 = vector.broadcast %28 : vector<8x8x1xf32> to vector<8x8x128xf32>
    %32 = arith.mulf %16, %31 : vector<8x8x128xf32>
    "tpu.trace_start"() <{level = 10 : i32, message = "tqd,tcd->tqc"}> : () -> ()
    %cst_12 = arith.constant dense<0.000000e+00> : vector<8x8x8xf32>
    %33 = tpu.matmul %30, %32, %cst_12 {dimension_numbers = #tpu.dot_dimension_numbers<[2], [2], [1], [1], [0, 0, 0, 1, 1, 1], [0], [0]>} : vector<8x8x128xf32>, vector<8x8x128xf32>, vector<8x8x8xf32> -> vector<8x8x8xf32>
    "tpu.trace_stop"() : () -> ()
    %c0_13 = arith.constant 0 : index
    %c0_14 = arith.constant 0 : index
    %c0_15 = arith.constant 0 : index
    %34 = vector.load %arg4[%c0_13, %c0_14, %c0_15] : memref<8x8x8xf32, #tpu.memory_space<vmem>>, vector<8x8x8xf32>
    tpu.vector_store %arg4[%c0_13, %c0_14, %c0_15], %33 {strides = array<i32>} : memref<8x8x8xf32, #tpu.memory_space<vmem>>, vector<8x8x8xf32>,
    return
  }
}

</mosaic_0001>

<llo_original>
// kernel: tpu_custom_call.1
$region0: #{tpu_custom_call.1}
  #allocation0 [shape = 'u32[]', space=smem, size = 0x4, offset = 0x4, fixed_abs, tag = 'smem constant byte address 0x4 - core index']
  #allocation1 [shape = 'u32[72,128]{1,0:T(1,128)}', space=vmem, size = 0x9000, scoped, tag = 'internal scratch']
  %s0 = inlined_call_operand.vmem [shape: s32[8,8], index: 0, kind: input, shape index: {}]
  %s1 = inlined_call_operand.vmem [shape: bf16[128,32], index: 1, kind: input, shape index: {}]
  %s2 = inlined_call_operand.vmem [shape: bf16[32,128], index: 2, kind: input, shape index: {}]
  %s3 = inlined_call_operand.vmem [shape: f32[1,128], index: 3, kind: input, shape index: {}]
  %s4 = inlined_call_operand.hbm [shape: f32[8,8,8], index: 4, kind: output, shape index: {}]
  %s5 = sld [smem:[#allocation0]]
  $region26: #{tpu_custom_call.1} parent=0
    _
  %s7 = ssub.s32 1, %s5
  %s8 = scalar_select 0, %s7, %s5
  $region1: #{tpu_custom_call.1} parent=0
    #allocation2 [shape = 'u8[32768]{0}', space=vmem, size = 0x8000, scoped, tag = 'output window, operand 0, single buffered']
    #allocation3 [shape = 's32[1]{0}', space=sflag, size = 0x4, scoped, tag = 'scoped memory for tpu_custom_call.1']
    %9 = vsyncpa [#allocation3], 0
    // Predicated region
    $region2: #{tpu_custom_call.1} parent=1 // pred_check
      _
    $region3: #{tpu_custom_call.1} parent=1 // pred_check_branch
      %11 = sbr.rel (0) target = $region5
    $region4: #{tpu_custom_call.1} parent=1 // pred_region
      _
    $region5: #{tpu_custom_call.1} parent=1 // pred_fallthru
      _
    // Predicated region
    $region6: #{tpu_custom_call.1} parent=1 // pred_check
      _
    $region7: #{tpu_custom_call.1} parent=1 // pred_check_branch
      %13 = sbr.rel (0) target = $region9
    $region8: #{tpu_custom_call.1} parent=1 // pred_region
      _
    $region9: #{tpu_custom_call.1} parent=1 // pred_fallthru
      _
    // Predicated region
    $region10: #{tpu_custom_call.1} parent=1 // pred_check
      _
    $region11: #{tpu_custom_call.1} parent=1 // pred_check_branch
      %15 = sbr.rel (0) target = $region13
    $region12: #{tpu_custom_call.1} parent=1 // pred_region
      _
    $region13: #{tpu_custom_call.1} parent=1 // pred_fallthru
      _
    // Predicated region
    $region14: #{tpu_custom_call.1} parent=1 // pred_check
      _
    $region15: #{tpu_custom_call.1} parent=1 // pred_check_branch
      %17 = sbr.rel (0) target = $region17
    $region16: #{tpu_custom_call.1} parent=1 // pred_region
      _
    $region17: #{tpu_custom_call.1} parent=1 // pred_fallthru
      _
    %v19 = vld [vmem:[%s1] sm:$0xf]
    %v20 = vld [vmem:[%s1 + $0x4] sm:$0xf]
    %v21 = vld [vmem:[%s1 + $0x8] sm:$0xf]
    %v22 = vld [vmem:[%s1 + $0xc] sm:$0xf]
    %v23 = vld [vmem:[%s1 + $0x10] sm:$0xf]
    %v24 = vld [vmem:[%s1 + $0x14] sm:$0xf]
    %v25 = vld [vmem:[%s1 + $0x18] sm:$0xf]
    %v26 = vld [vmem:[%s1 + $0x1c] sm:$0xf]
    %v27 = vld [vmem:[%s1 + $0x20] sm:$0xf]
    %v28 = vld [vmem:[%s1 + $0x24] sm:$0xf]
    %v29 = vld [vmem:[%s1 + $0x28] sm:$0xf]
    %v30 = vld [vmem:[%s1 + $0x2c] sm:$0xf]
    %v31 = vld [vmem:[%s1 + $0x30] sm:$0xf]
    %v32 = vld [vmem:[%s1 + $0x34] sm:$0xf]
    %v33 = vld [vmem:[%s1 + $0x38] sm:$0xf]
    %v34 = vld [vmem:[%s1 + $0x3c] sm:$0xf]
    %v35 = vld [vmem:[%s2] sm:$0xf]
    %v36 = vld [vmem:[%s2 + $0x4] sm:$0xf]
    %v37 = vld [vmem:[%s2 + $0x8] sm:$0xf]
    %v38 = vld [vmem:[%s2 + $0xc] sm:$0xf]
    %v39 = vld [vmem:[%s3] sm:$0x1]
    %v41 = vperm.slane %v39, 0
    %v59 = vunpack.c.l.b16 %v19
    %v60 = vunpack.c.l.b16 %v20
    %v61 = vunpack.c.l.b16 %v21
    %v62 = vunpack.c.l.b16 %v22
    %v63 = vunpack.c.l.b16 %v23
    %v64 = vunpack.c.l.b16 %v24
    %v65 = vunpack.c.l.b16 %v25
    %v66 = vunpack.c.l.b16 %v26
    %v67 = vunpack.c.l.b16 %v27
    %v68 = vunpack.c.l.b16 %v28
    %v69 = vunpack.c.l.b16 %v29
    %v70 = vunpack.c.l.b16 %v30
    %v71 = vunpack.c.l.b16 %v31
    %v72 = vunpack.c.l.b16 %v32
    %v73 = vunpack.c.l.b16 %v33
    %v74 = vunpack.c.l.b16 %v34
    %v75 = vpack.c.b16 %v60, %v59
    %v76 = vpack.c.b16 %v62, %v61
    %v77 = vpack.c.b16 %v64, %v63
    %v78 = vpack.c.b16 %v66, %v65
    %v79 = vpack.c.b16 %v68, %v67
    %v80 = vpack.c.b16 %v70, %v69
    %v81 = vpack.c.b16 %v72, %v71
    %v82 = vpack.c.b16 %v74, %v73
    %v87 = vunpack.c.l.b16 %v35
    %v88 = vunpack.c.l.b16 %v36
    %v89 = vunpack.c.l.b16 %v37
    %v90 = vunpack.c.l.b16 %v38
    %v91 = vpack.c.b16 %v88, %v87
    %v92 = vpack.c.b16 %v90, %v89
    %vm95 = vcmask 261120
    %v97 = vsel %vm95, %v75, 0
    %v100 = vsel %vm95, %v76, 0
    %v103 = vsel %vm95, %v77, 0
    %v106 = vsel %vm95, %v78, 0
    %v109 = vsel %vm95, %v79, 0
    %v112 = vsel %vm95, %v80, 0
    %v115 = vsel %vm95, %v81, 0
    %v118 = vsel %vm95, %v82, 0
    %120 = vmatpush.bf16.msra.mxu0 0
    %121 = vmatpush.bf16.msra.mxu0 0
    %122 = vmatpush.bf16.msra.mxu0 0
    %123 = vmatpush.bf16.msra.mxu0 0
    %124 = vmatpush.bf16.msra.mxu0 0
    %125 = vmatpush.bf16.msra.mxu0 0
    %126 = vmatpush.bf16.msra.mxu0 %v92
    %127 = vmatpush.bf16.msra.mxu0 %v91
    %128 = vmatmul.bf16.gmra.mxu0 %v97
    %v129 = vpop.f32.mrf.mxu0
    %v130 = vadd.f32 %v41, %v129
    %v131 = vpop.f32.mrf.mxu0
    %v132 = vadd.f32 %v41, %v131
    %133 = vmatmul.bf16.gmra.mxu0 %v100
    %v134 = vpop.f32.mrf.mxu0
    %v135 = vadd.f32 %v41, %v134
    %v136 = vpop.f32.mrf.mxu0
    %v137 = vadd.f32 %v41, %v136
    %138 = vmatmul.bf16.gmra.mxu0 %v103
    %v139 = vpop.f32.mrf.mxu0
    %v140 = vadd.f32 %v41, %v139
    %v141 = vpop.f32.mrf.mxu0
    %v142 = vadd.f32 %v41, %v141
    %143 = vmatmul.bf16.gmra.mxu0 %v106
    %v144 = vpop.f32.mrf.mxu0
    %v145 = vadd.f32 %v41, %v144
    %v146 = vpop.f32.mrf.mxu0
    %v147 = vadd.f32 %v41, %v146
    %148 = vmatmul.bf16.gmra.mxu0 %v109
    %v149 = vpop.f32.mrf.mxu0
    %v150 = vadd.f32 %v41, %v149
    %v151 = vpop.f32.mrf.mxu0
    %v152 = vadd.f32 %v41, %v151
    %153 = vmatmul.bf16.gmra.mxu0 %v112
    %v154 = vpop.f32.mrf.mxu0
    %v155 = vadd.f32 %v41, %v154
    %v156 = vpop.f32.mrf.mxu0
    %v157 = vadd.f32 %v41, %v156
    %158 = vmatmul.bf16.gmra.mxu0 %v115
    %v159 = vpop.f32.mrf.mxu0
    %v160 = vadd.f32 %v41, %v159
    %v161 = vpop.f32.mrf.mxu0
    %v162 = vadd.f32 %v41, %v161
    %163 = vmatmul.bf16.gmra.mxu0 %v118
    %v164 = vpop.f32.mrf.mxu0
    %v165 = vadd.f32 %v41, %v164
    %v166 = vpop.f32.mrf.mxu0
    %v167 = vadd.f32 %v41, %v166
    %168 = vdwg.mxu0
    %v169 = vlaneseq
    %v170 = vand.u32 %v169, 127
    %v171 = vld [vmem:[%s0] sm:$0xff]
    %v172 = vperm.slane %v171, 0
    %v173 = vlaneseq
    %v174 = vshrl.u32 %v173, 7
    %176 = vset.pattern.permute.xlu0 %v174
    %177 = vperm.xlu0 %176, %v172
    %v178 = vpop.permute.xlu0 %177
    %v179 = vperm.slane %v171, 1
    %v180 = vlaneseq
    %v181 = vshrl.u32 %v180, 7
    %183 = vset.pattern.permute.xlu0 %v181
    %184 = vperm.xlu0 %183, %v179
    %v185 = vpop.permute.xlu0 %184
    %v186 = vperm.slane %v171, 2
    %v187 = vlaneseq
    %v188 = vshrl.u32 %v187, 7
    %190 = vset.pattern.permute.xlu0 %v188
    %191 = vperm.xlu0 %190, %v186
    %v192 = vpop.permute.xlu0 %191
    %v193 = vperm.slane %v171, 3
    %v194 = vlaneseq
    %v195 = vshrl.u32 %v194, 7
    %197 = vset.pattern.permute.xlu0 %v195
    %198 = vperm.xlu0 %197, %v193
    %v199 = vpop.permute.xlu0 %198
    %v200 = vperm.slane %v171, 4
    %v201 = vlaneseq
    %v202 = vshrl.u32 %v201, 7
    %204 = vset.pattern.permute.xlu0 %v202
    %205 = vperm.xlu0 %204, %v200
    %v206 = vpop.permute.xlu0 %205
    %v207 = vperm.slane %v171, 5
    %v208 = vlaneseq
    %v209 = vshrl.u32 %v208, 7
    %211 = vset.pattern.permute.xlu0 %v209
    %212 = vperm.xlu0 %211, %v207
    %v213 = vpop.permute.xlu0 %212
    %v214 = vperm.slane %v171, 6
    %v215 = vlaneseq
    %v216 = vshrl.u32 %v215, 7
    %218 = vset.pattern.permute.xlu0 %v216
    %219 = vperm.xlu0 %218, %v214
    %v220 = vpop.permute.xlu0 %219
    %v221 = vperm.slane %v171, 7
    %v222 = vlaneseq
    %v223 = vshrl.u32 %v222, 7
    %225 = vset.pattern.permute.xlu0 %v223
    %226 = vperm.xlu0 %225, %v221
    %v227 = vpop.permute.xlu0 %226
    %vm228 = vcmp.eq.s32.totalorder %v178, %v170
    %vm229 = vcmp.eq.s32.totalorder %v185, %v170
    %vm230 = vcmp.eq.s32.totalorder %v192, %v170
    %vm231 = vcmp.eq.s32.totalorder %v199, %v170
    %vm232 = vcmp.eq.s32.totalorder %v206, %v170
    %vm233 = vcmp.eq.s32.totalorder %v213, %v170
    %vm234 = vcmp.eq.s32.totalorder %v220, %v170
    %vm235 = vcmp.eq.s32.totalorder %v227, %v170
    %v236 = vsel %vm228, 1, 0
    %v237 = vsel %vm229, 1, 0
    %v238 = vsel %vm230, 1, 0
    %v239 = vsel %vm231, 1, 0
    %v240 = vsel %vm232, 1, 0
    %v241 = vsel %vm233, 1, 0
    %v242 = vsel %vm234, 1, 0
    %v243 = vsel %vm235, 1, 0
    %v244 = vcvt.s32.f32 %v236
    %v245 = vcvt.s32.f32 %v237
    %v246 = vcvt.s32.f32 %v238
    %v247 = vcvt.s32.f32 %v239
    %v248 = vcvt.s32.f32 %v240
    %v249 = vcvt.s32.f32 %v241
    %v250 = vcvt.s32.f32 %v242
    %v251 = vcvt.s32.f32 %v243
    %252 = vxpose.xlu0.b32.start [1/16] %v244, 128
    %253 = vxpose.xlu0.b32.cont [2/16] 0.0, 128
    %254 = vxpose.xlu0.b32.cont [3/16] 0.0, 128
    %255 = vxpose.xlu0.b32.cont [4/16] 0.0, 128
    %256 = vxpose.xlu0.b32.cont [5/16] 0.0, 128
    %257 = vxpose.xlu0.b32.cont [6/16] 0.0, 128
    %258 = vxpose.xlu0.b32.cont [7/16] 0.0, 128
    %259 = vxpose.xlu0.b32.cont [8/16] 0.0, 128
    %260 = vxpose.xlu0.b32.cont [9/16] 0.0, 128
    %261 = vxpose.xlu0.b32.cont [10/16] 0.0, 128
    %262 = vxpose.xlu0.b32.cont [11/16] 0.0, 128
    %263 = vxpose.xlu0.b32.cont [12/16] 0.0, 128
    %264 = vxpose.xlu0.b32.cont [13/16] 0.0, 128
    %265 = vxpose.xlu0.b32.cont [14/16] 0.0, 128
    %266 = vxpose.xlu0.b32.cont [15/16] 0.0, 128
    %267 = vxpose.xlu0.b32.end [16/16] 0.0, 128
    %v268 = vpop.trf.xlu0
    %v269 = vpop.trf.xlu0
    %v270 = vpop.trf.xlu0
    %v271 = vpop.trf.xlu0
    %v272 = vpop.trf.xlu0
    %v273 = vpop.trf.xlu0
    %v274 = vpop.trf.xlu0
    %v275 = vpop.trf.xlu0
    %v276 = vpop.trf.xlu0
    %v277 = vpop.trf.xlu0
    %v278 = vpop.trf.xlu0
    %v279 = vpop.trf.xlu0
    %v280 = vpop.trf.xlu0
    %v281 = vpop.trf.xlu0
    %v282 = vpop.trf.xlu0
    %v283 = vpop.trf.xlu0
    %vm284 = vcmask 64512
    %v286 = vsel %vm284, %v268, 0
    %288 = vmatpush.msra.mxu0 0.0
    %289 = vmatpush.msra.mxu0 0.0
    %290 = vmatpush.msra.mxu0 0.0
    %291 = vmatpush.msra.mxu0 0.0
    %292 = vmatpush.msra.mxu0 0.0
    %293 = vmatpush.msra.mxu0 0.0
    %294 = vmatpush.msra.mxu0 0.0
    %295 = vmatpush.msra.mxu0 0.0
    %296 = vmatpush.msra.mxu0 0.0
    %297 = vmatpush.msra.mxu0 0.0
    %298 = vmatpush.msra.mxu0 0.0
    %299 = vmatpush.msra.mxu0 0.0
    %300 = vmatpush.msra.mxu0 0.0
    %301 = vmatpush.msra.mxu0 0.0
    %302 = vmatpush.msra.mxu0 0.0
    %303 = vmatpush.msra.mxu0 %v130
    %304 = vmatmul.f32.gmra.mxu0 %v286
    %v305 = vpop.f32.mrf.mxu0
    %v306 = vadd.f32 0.0, %v305
    %307 = vdwg.mxu0
    %308 = vxpose.xlu0.b32.start [1/16] %v245, 128
    %309 = vxpose.xlu0.b32.cont [2/16] 0.0, 128
    %310 = vxpose.xlu0.b32.cont [3/16] 0.0, 128
    %311 = vxpose.xlu0.b32.cont [4/16] 0.0, 128
    %312 = vxpose.xlu0.b32.cont [5/16] 0.0, 128
    %313 = vxpose.xlu0.b32.cont [6/16] 0.0, 128
    %314 = vxpose.xlu0.b32.cont [7/16] 0.0, 128
    %315 = vxpose.xlu0.b32.cont [8/16] 0.0, 128
    %316 = vxpose.xlu0.b32.cont [9/16] 0.0, 128
    %317 = vxpose.xlu0.b32.cont [10/16] 0.0, 128
    %318 = vxpose.xlu0.b32.cont [11/16] 0.0, 128
    %319 = vxpose.xlu0.b32.cont [12/16] 0.0, 128
    %320 = vxpose.xlu0.b32.cont [13/16] 0.0, 128
    %321 = vxpose.xlu0.b32.cont [14/16] 0.0, 128
    %322 = vxpose.xlu0.b32.cont [15/16] 0.0, 128
    %323 = vxpose.xlu0.b32.end [16/16] 0.0, 128
    %v324 = vpop.trf.xlu0
    %v325 = vpop.trf.xlu0
    %v326 = vpop.trf.xlu0
    %v327 = vpop.trf.xlu0
    %v328 = vpop.trf.xlu0
    %v329 = vpop.trf.xlu0
    %v330 = vpop.trf.xlu0
    %v331 = vpop.trf.xlu0
    %v332 = vpop.trf.xlu0
    %v333 = vpop.trf.xlu0
    %v334 = vpop.trf.xlu0
    %v335 = vpop.trf.xlu0
    %v336 = vpop.trf.xlu0
    %v337 = vpop.trf.xlu0
    %v338 = vpop.trf.xlu0
    %v339 = vpop.trf.xlu0
    %v341 = vsel %vm284, %v324, 0
    %343 = vmatpush.msra.mxu0 0.0
    %344 = vmatpush.msra.mxu0 0.0
    %345 = vmatpush.msra.mxu0 0.0
    %346 = vmatpush.msra.mxu0 0.0
    %347 = vmatpush.msra.mxu0 0.0
    %348 = vmatpush.msra.mxu0 0.0
    %349 = vmatpush.msra.mxu0 0.0
    %350 = vmatpush.msra.mxu0 0.0
    %351 = vmatpush.msra.mxu0 0.0
    %352 = vmatpush.msra.mxu0 0.0
    %353 = vmatpush.msra.mxu0 0.0
    %354 = vmatpush.msra.mxu0 0.0
    %355 = vmatpush.msra.mxu0 0.0
    %356 = vmatpush.msra.mxu0 0.0
    %357 = vmatpush.msra.mxu0 0.0
    %358 = vmatpush.msra.mxu0 %v135
    %359 = vmatmul.f32.gmra.mxu0 %v341
    %v360 = vpop.f32.mrf.mxu0
    %v361 = vadd.f32 0.0, %v360
    %362 = vdwg.mxu0
    %363 = vxpose.xlu0.b32.start [1/16] %v246, 128
    %364 = vxpose.xlu0.b32.cont [2/16] 0.0, 128
    %365 = vxpose.xlu0.b32.cont [3/16] 0.0, 128
    %366 = vxpose.xlu0.b32.cont [4/16] 0.0, 128
    %367 = vxpose.xlu0.b32.cont [5/16] 0.0, 128
    %368 = vxpose.xlu0.b32.cont [6/16] 0.0, 128
    %369 = vxpose.xlu0.b32.cont [7/16] 0.0, 128
    %370 = vxpose.xlu0.b32.cont [8/16] 0.0, 128
    %371 = vxpose.xlu0.b32.cont [9/16] 0.0, 128
    %372 = vxpose.xlu0.b32.cont [10/16] 0.0, 128
    %373 = vxpose.xlu0.b32.cont [11/16] 0.0, 128
    %374 = vxpose.xlu0.b32.cont [12/16] 0.0, 128
    %375 = vxpose.xlu0.b32.cont [13/16] 0.0, 128
    %376 = vxpose.xlu0.b32.cont [14/16] 0.0, 128
    %377 = vxpose.xlu0.b32.cont [15/16] 0.0, 128
    %378 = vxpose.xlu0.b32.end [16/16] 0.0, 128
    %v379 = vpop.trf.xlu0
    %v380 = vpop.trf.xlu0
    %v381 = vpop.trf.xlu0
    %v382 = vpop.trf.xlu0
    %v383 = vpop.trf.xlu0
    %v384 = vpop.trf.xlu0
    %v385 = vpop.trf.xlu0
    %v386 = vpop.trf.xlu0
    %v387 = vpop.trf.xlu0
    %v388 = vpop.trf.xlu0
    %v389 = vpop.trf.xlu0
    %v390 = vpop.trf.xlu0
    %v391 = vpop.trf.xlu0
    %v392 = vpop.trf.xlu0
    %v393 = vpop.trf.xlu0
    %v394 = vpop.trf.xlu0
    %v396 = vsel %vm284, %v379, 0
    %398 = vmatpush.msra.mxu0 0.0
    %399 = vmatpush.msra.mxu0 0.0
    %400 = vmatpush.msra.mxu0 0.0
    %401 = vmatpush.msra.mxu0 0.0
    %402 = vmatpush.msra.mxu0 0.0
    %403 = vmatpush.msra.mxu0 0.0
    %404 = vmatpush.msra.mxu0 0.0
    %405 = vmatpush.msra.mxu0 0.0
    %406 = vmatpush.msra.mxu0 0.0
    %407 = vmatpush.msra.mxu0 0.0
    %408 = vmatpush.msra.mxu0 0.0
    %409 = vmatpush.msra.mxu0 0.0
    %410 = vmatpush.msra.mxu0 0.0
    %411 = vmatpush.msra.mxu0 0.0
    %412 = vmatpush.msra.mxu0 0.0
    %413 = vmatpush.msra.mxu0 %v140
    %414 = vmatmul.f32.gmra.mxu0 %v396
    %v415 = vpop.f32.mrf.mxu0
    %v416 = vadd.f32 0.0, %v415
    %417 = vdwg.mxu0
    %418 = vxpose.xlu0.b32.start [1/16] %v247, 128
    %419 = vxpose.xlu0.b32.cont [2/16] 0.0, 128
    %420 = vxpose.xlu0.b32.cont [3/16] 0.0, 128
    %421 = vxpose.xlu0.b32.cont [4/16] 0.0, 128
    %422 = vxpose.xlu0.b32.cont [5/16] 0.0, 128
    %423 = vxpose.xlu0.b32.cont [6/16] 0.0, 128
    %424 = vxpose.xlu0.b32.cont [7/16] 0.0, 128
    %425 = vxpose.xlu0.b32.cont [8/16] 0.0, 128
    %426 = vxpose.xlu0.b32.cont [9/16] 0.0, 128
    %427 = vxpose.xlu0.b32.cont [10/16] 0.0, 128
    %428 = vxpose.xlu0.b32.cont [11/16] 0.0, 128
    %429 = vxpose.xlu0.b32.cont [12/16] 0.0, 128
    %430 = vxpose.xlu0.b32.cont [13/16] 0.0, 128
    %431 = vxpose.xlu0.b32.cont [14/16] 0.0, 128
    %432 = vxpose.xlu0.b32.cont [15/16] 0.0, 128
    %433 = vxpose.xlu0.b32.end [16/16] 0.0, 128
    %v434 = vpop.trf.xlu0
    %v435 = vpop.trf.xlu0
    %v436 = vpop.trf.xlu0
    %v437 = vpop.trf.xlu0
    %v438 = vpop.trf.xlu0
    %v439 = vpop.trf.xlu0
    %v440 = vpop.trf.xlu0
    %v441 = vpop.trf.xlu0
    %v442 = vpop.trf.xlu0
    %v443 = vpop.trf.xlu0
    %v444 = vpop.trf.xlu0
    %v445 = vpop.trf.xlu0
    %v446 = vpop.trf.xlu0
    %v447 = vpop.trf.xlu0
    %v448 = vpop.trf.xlu0
    %v449 = vpop.trf.xlu0
    %v451 = vsel %vm284, %v434, 0
    %453 = vmatpush.msra.mxu0 0.0
    %454 = vmatpush.msra.mxu0 0.0
    %455 = vmatpush.msra.mxu0 0.0
    %456 = vmatpush.msra.mxu0 0.0
    %457 = vmatpush.msra.mxu0 0.0
    %458 = vmatpush.msra.mxu0 0.0
    %459 = vmatpush.msra.mxu0 0.0
    %460 = vmatpush.msra.mxu0 0.0
    %461 = vmatpush.msra.mxu0 0.0
    %462 = vmatpush.msra.mxu0 0.0
    %463 = vmatpush.msra.mxu0 0.0
    %464 = vmatpush.msra.mxu0 0.0
    %465 = vmatpush.msra.mxu0 0.0
    %466 = vmatpush.msra.mxu0 0.0
    %467 = vmatpush.msra.mxu0 0.0
    %468 = vmatpush.msra.mxu0 %v145
    %469 = vmatmul.f32.gmra.mxu0 %v451
    %v470 = vpop.f32.mrf.mxu0
    %v471 = vadd.f32 0.0, %v470
    %472 = vdwg.mxu0
    %473 = vxpose.xlu0.b32.start [1/16] %v248, 128
    %474 = vxpose.xlu0.b32.cont [2/16] 0.0, 128
    %475 = vxpose.xlu0.b32.cont [3/16] 0.0, 128
    %476 = vxpose.xlu0.b32.cont [4/16] 0.0, 128
    %477 = vxpose.xlu0.b32.cont [5/16] 0.0, 128
    %478 = vxpose.xlu0.b32.cont [6/16] 0.0, 128
    %479 = vxpose.xlu0.b32.cont [7/16] 0.0, 128
    %480 = vxpose.xlu0.b32.cont [8/16] 0.0, 128
    %481 = vxpose.xlu0.b32.cont [9/16] 0.0, 128
    %482 = vxpose.xlu0.b32.cont [10/16] 0.0, 128
    %483 = vxpose.xlu0.b32.cont [11/16] 0.0, 128
    %484 = vxpose.xlu0.b32.cont [12/16] 0.0, 128
    %485 = vxpose.xlu0.b32.cont [13/16] 0.0, 128
    %486 = vxpose.xlu0.b32.cont [14/16] 0.0, 128
    %487 = vxpose.xlu0.b32.cont [15/16] 0.0, 128
    %488 = vxpose.xlu0.b32.end [16/16] 0.0, 128
    %v489 = vpop.trf.xlu0
    %v490 = vpop.trf.xlu0
    %v491 = vpop.trf.xlu0
    %v492 = vpop.trf.xlu0
    %v493 = vpop.trf.xlu0
    %v494 = vpop.trf.xlu0
    %v495 = vpop.trf.xlu0
    %v496 = vpop.trf.xlu0
    %v497 = vpop.trf.xlu0
    %v498 = vpop.trf.xlu0
    %v499 = vpop.trf.xlu0
    %v500 = vpop.trf.xlu0
    %v501 = vpop.trf.xlu0
    %v502 = vpop.trf.xlu0
    %v503 = vpop.trf.xlu0
    %v504 = vpop.trf.xlu0
    %v506 = vsel %vm284, %v489, 0
    %508 = vmatpush.msra.mxu0 0.0
    %509 = vmatpush.msra.mxu0 0.0
    %510 = vmatpush.msra.mxu0 0.0
    %511 = vmatpush.msra.mxu0 0.0
    %512 = vmatpush.msra.mxu0 0.0
    %513 = vmatpush.msra.mxu0 0.0
    %514 = vmatpush.msra.mxu0 0.0
    %515 = vmatpush.msra.mxu0 0.0
    %516 = vmatpush.msra.mxu0 0.0
    %517 = vmatpush.msra.mxu0 0.0
    %518 = vmatpush.msra.mxu0 0.0
    %519 = vmatpush.msra.mxu0 0.0
    %520 = vmatpush.msra.mxu0 0.0
    %521 = vmatpush.msra.mxu0 0.0
    %522 = vmatpush.msra.mxu0 0.0
    %523 = vmatpush.msra.mxu0 %v150
    %524 = vmatmul.f32.gmra.mxu0 %v506
    %v525 = vpop.f32.mrf.mxu0
    %v526 = vadd.f32 0.0, %v525
    %527 = vdwg.mxu0
    %528 = vxpose.xlu0.b32.start [1/16] %v249, 128
    %529 = vxpose.xlu0.b32.cont [2/16] 0.0, 128
    %530 = vxpose.xlu0.b32.cont [3/16] 0.0, 128
    %531 = vxpose.xlu0.b32.cont [4/16] 0.0, 128
    %532 = vxpose.xlu0.b32.cont [5/16] 0.0, 128
    %533 = vxpose.xlu0.b32.cont [6/16] 0.0, 128
    %534 = vxpose.xlu0.b32.cont [7/16] 0.0, 128
    %535 = vxpose.xlu0.b32.cont [8/16] 0.0, 128
    %536 = vxpose.xlu0.b32.cont [9/16] 0.0, 128
    %537 = vxpose.xlu0.b32.cont [10/16] 0.0, 128
    %538 = vxpose.xlu0.b32.cont [11/16] 0.0, 128
    %539 = vxpose.xlu0.b32.cont [12/16] 0.0, 128
    %540 = vxpose.xlu0.b32.cont [13/16] 0.0, 128
    %541 = vxpose.xlu0.b32.cont [14/16] 0.0, 128
    %542 = vxpose.xlu0.b32.cont [15/16] 0.0, 128
    %543 = vxpose.xlu0.b32.end [16/16] 0.0, 128
    %v544 = vpop.trf.xlu0
    %v545 = vpop.trf.xlu0
    %v546 = vpop.trf.xlu0
    %v547 = vpop.trf.xlu0
    %v548 = vpop.trf.xlu0
    %v549 = vpop.trf.xlu0
    %v550 = vpop.trf.xlu0
    %v551 = vpop.trf.xlu0
    %v552 = vpop.trf.xlu0
    %v553 = vpop.trf.xlu0
    %v554 = vpop.trf.xlu0
    %v555 = vpop.trf.xlu0
    %v556 = vpop.trf.xlu0
    %v557 = vpop.trf.xlu0
    %v558 = vpop.trf.xlu0
    %v559 = vpop.trf.xlu0
    %v561 = vsel %vm284, %v544, 0
    %563 = vmatpush.msra.mxu0 0.0
    %564 = vmatpush.msra.mxu0 0.0
    %565 = vmatpush.msra.mxu0 0.0
    %566 = vmatpush.msra.mxu0 0.0
    %567 = vmatpush.msra.mxu0 0.0
    %568 = vmatpush.msra.mxu0 0.0
    %569 = vmatpush.msra.mxu0 0.0
    %570 = vmatpush.msra.mxu0 0.0
    %571 = vmatpush.msra.mxu0 0.0
    %572 = vmatpush.msra.mxu0 0.0
    %573 = vmatpush.msra.mxu0 0.0
    %574 = vmatpush.msra.mxu0 0.0
    %575 = vmatpush.msra.mxu0 0.0
    %576 = vmatpush.msra.mxu0 0.0
    %577 = vmatpush.msra.mxu0 0.0
    %578 = vmatpush.msra.mxu0 %v155
    %579 = vmatmul.f32.gmra.mxu0 %v561
    %v580 = vpop.f32.mrf.mxu0
    %v581 = vadd.f32 0.0, %v580
    %582 = vdwg.mxu0
    %583 = vxpose.xlu0.b32.start [1/16] %v250, 128
    %584 = vxpose.xlu0.b32.cont [2/16] 0.0, 128
    %585 = vxpose.xlu0.b32.cont [3/16] 0.0, 128
    %586 = vxpose.xlu0.b32.cont [4/16] 0.0, 128
    %587 = vxpose.xlu0.b32.cont [5/16] 0.0, 128
    %588 = vxpose.xlu0.b32.cont [6/16] 0.0, 128
    %589 = vxpose.xlu0.b32.cont [7/16] 0.0, 128
    %590 = vxpose.xlu0.b32.cont [8/16] 0.0, 128
    %591 = vxpose.xlu0.b32.cont [9/16] 0.0, 128
    %592 = vxpose.xlu0.b32.cont [10/16] 0.0, 128
    %593 = vxpose.xlu0.b32.cont [11/16] 0.0, 128
    %594 = vxpose.xlu0.b32.cont [12/16] 0.0, 128
    %595 = vxpose.xlu0.b32.cont [13/16] 0.0, 128
    %596 = vxpose.xlu0.b32.cont [14/16] 0.0, 128
    %597 = vxpose.xlu0.b32.cont [15/16] 0.0, 128
    %598 = vxpose.xlu0.b32.end [16/16] 0.0, 128
    %v599 = vpop.trf.xlu0
    %v600 = vpop.trf.xlu0
    %v601 = vpop.trf.xlu0
    %v602 = vpop.trf.xlu0
    %v603 = vpop.trf.xlu0
    %v604 = vpop.trf.xlu0
    %v605 = vpop.trf.xlu0
    %v606 = vpop.trf.xlu0
    %v607 = vpop.trf.xlu0
    %v608 = vpop.trf.xlu0
    %v609 = vpop.trf.xlu0
    %v610 = vpop.trf.xlu0
    %v611 = vpop.trf.xlu0
    %v612 = vpop.trf.xlu0
    %v613 = vpop.trf.xlu0
    %v614 = vpop.trf.xlu0
    %v616 = vsel %vm284, %v599, 0
    %618 = vmatpush.msra.mxu0 0.0
    %619 = vmatpush.msra.mxu0 0.0
    %620 = vmatpush.msra.mxu0 0.0
    %621 = vmatpush.msra.mxu0 0.0
    %622 = vmatpush.msra.mxu0 0.0
    %623 = vmatpush.msra.mxu0 0.0
    %624 = vmatpush.msra.mxu0 0.0
    %625 = vmatpush.msra.mxu0 0.0
    %626 = vmatpush.msra.mxu0 0.0
    %627 = vmatpush.msra.mxu0 0.0
    %628 = vmatpush.msra.mxu0 0.0
    %629 = vmatpush.msra.mxu0 0.0
    %630 = vmatpush.msra.mxu0 0.0
    %631 = vmatpush.msra.mxu0 0.0
    %632 = vmatpush.msra.mxu0 0.0
    %633 = vmatpush.msra.mxu0 %v160
    %634 = vmatmul.f32.gmra.mxu0 %v616
    %v635 = vpop.f32.mrf.mxu0
    %v636 = vadd.f32 0.0, %v635
    %637 = vdwg.mxu0
    %638 = vxpose.xlu0.b32.start [1/16] %v251, 128
    %639 = vxpose.xlu0.b32.cont [2/16] 0.0, 128
    %640 = vxpose.xlu0.b32.cont [3/16] 0.0, 128
    %641 = vxpose.xlu0.b32.cont [4/16] 0.0, 128
    %642 = vxpose.xlu0.b32.cont [5/16] 0.0, 128
    %643 = vxpose.xlu0.b32.cont [6/16] 0.0, 128
    %644 = vxpose.xlu0.b32.cont [7/16] 0.0, 128
    %645 = vxpose.xlu0.b32.cont [8/16] 0.0, 128
    %646 = vxpose.xlu0.b32.cont [9/16] 0.0, 128
    %647 = vxpose.xlu0.b32.cont [10/16] 0.0, 128
    %648 = vxpose.xlu0.b32.cont [11/16] 0.0, 128
    %649 = vxpose.xlu0.b32.cont [12/16] 0.0, 128
    %650 = vxpose.xlu0.b32.cont [13/16] 0.0, 128
    %651 = vxpose.xlu0.b32.cont [14/16] 0.0, 128
    %652 = vxpose.xlu0.b32.cont [15/16] 0.0, 128
    %653 = vxpose.xlu0.b32.end [16/16] 0.0, 128
    %v654 = vpop.trf.xlu0
    %v655 = vpop.trf.xlu0
    %v656 = vpop.trf.xlu0
    %v657 = vpop.trf.xlu0
    %v658 = vpop.trf.xlu0
    %v659 = vpop.trf.xlu0
    %v660 = vpop.trf.xlu0
    %v661 = vpop.trf.xlu0
    %v662 = vpop.trf.xlu0
    %v663 = vpop.trf.xlu0
    %v664 = vpop.trf.xlu0
    %v665 = vpop.trf.xlu0
    %v666 = vpop.trf.xlu0
    %v667 = vpop.trf.xlu0
    %v668 = vpop.trf.xlu0
    %v669 = vpop.trf.xlu0
    %v671 = vsel %vm284, %v654, 0
    %673 = vmatpush.msra.mxu0 0.0
    %674 = vmatpush.msra.mxu0 0.0
    %675 = vmatpush.msra.mxu0 0.0
    %676 = vmatpush.msra.mxu0 0.0
    %677 = vmatpush.msra.mxu0 0.0
    %678 = vmatpush.msra.mxu0 0.0
    %679 = vmatpush.msra.mxu0 0.0
    %680 = vmatpush.msra.mxu0 0.0
    %681 = vmatpush.msra.mxu0 0.0
    %682 = vmatpush.msra.mxu0 0.0
    %683 = vmatpush.msra.mxu0 0.0
    %684 = vmatpush.msra.mxu0 0.0
    %685 = vmatpush.msra.mxu0 0.0
    %686 = vmatpush.msra.mxu0 0.0
    %687 = vmatpush.msra.mxu0 0.0
    %688 = vmatpush.msra.mxu0 %v165
    %689 = vmatmul.f32.gmra.mxu0 %v671
    %v690 = vpop.f32.mrf.mxu0
    %v691 = vadd.f32 0.0, %v690
    %692 = vdwg.mxu0
    %v693 = vmul.f32 %v132, %v132
    %v694 = vmul.f32 %v137, %v137
    %v695 = vmul.f32 %v142, %v142
    %v696 = vmul.f32 %v147, %v147
    %v697 = vmul.f32 %v152, %v152
    %v698 = vmul.f32 %v157, %v157
    %v699 = vmul.f32 %v162, %v162
    %v700 = vmul.f32 %v167, %v167
    %701 = vadd.xlane.f32.xlu0 %v693
    %v702 = vpop.xlane.xlu0 %701
    %703 = vadd.xlane.f32.xlu0 %v694
    %v704 = vpop.xlane.xlu0 %703
    %705 = vadd.xlane.f32.xlu0 %v695
    %v706 = vpop.xlane.xlu0 %705
    %707 = vadd.xlane.f32.xlu0 %v696
    %v708 = vpop.xlane.xlu0 %707
    %709 = vadd.xlane.f32.xlu0 %v697
    %v710 = vpop.xlane.xlu0 %709
    %711 = vadd.xlane.f32.xlu0 %v698
    %v712 = vpop.xlane.xlu0 %711
    %713 = vadd.xlane.f32.xlu0 %v699
    %v714 = vpop.xlane.xlu0 %713
    %715 = vadd.xlane.f32.xlu0 %v700
    %v716 = vpop.xlane.xlu0 %715
    %v717 = vmax.f32 %v702, 1e-16
    %v718 = vmax.f32 %v704, 1e-16
    %v719 = vmax.f32 %v706, 1e-16
    %v720 = vmax.f32 %v708, 1e-16
    %v721 = vmax.f32 %v710, 1e-16
    %v722 = vmax.f32 %v712, 1e-16
    %v723 = vmax.f32 %v714, 1e-16
    %v724 = vmax.f32 %v716, 1e-16
    %v725 = vrsqrt.pop %v717
    %v726 = vmul.f32 %v725, %v717
    %v727 = vmul.f32 %v726, %v725
    %v728 = vmul.f32 0.5, %v727
    %v729 = vsub.f32 1.5, %v728
    %v730 = vmul.f32 %v725, %v729
    %vm731 = vweird.f32 %v717
    %vm732 = vweird.f32 %v725
    %vm733 = vmor %vm731, %vm732
    %v734 = vsel %vm733, %v725, %v730
    %v735 = vrsqrt.pop %v718
    %v736 = vmul.f32 %v735, %v718
    %v737 = vmul.f32 %v736, %v735
    %v738 = vmul.f32 0.5, %v737
    %v739 = vsub.f32 1.5, %v738
    %v740 = vmul.f32 %v735, %v739
    %vm741 = vweird.f32 %v718
    %vm742 = vweird.f32 %v735
    %vm743 = vmor %vm741, %vm742
    %v744 = vsel %vm743, %v735, %v740
    %v745 = vrsqrt.pop %v719
    %v746 = vmul.f32 %v745, %v719
    %v747 = vmul.f32 %v746, %v745
    %v748 = vmul.f32 0.5, %v747
    %v749 = vsub.f32 1.5, %v748
    %v750 = vmul.f32 %v745, %v749
    %vm751 = vweird.f32 %v719
    %vm752 = vweird.f32 %v745
    %vm753 = vmor %vm751, %vm752
    %v754 = vsel %vm753, %v745, %v750
    %v755 = vrsqrt.pop %v720
    %v756 = vmul.f32 %v755, %v720
    %v757 = vmul.f32 %v756, %v755
    %v758 = vmul.f32 0.5, %v757
    %v759 = vsub.f32 1.5, %v758
    %v760 = vmul.f32 %v755, %v759
    %vm761 = vweird.f32 %v720
    %vm762 = vweird.f32 %v755
    %vm763 = vmor %vm761, %vm762
    %v764 = vsel %vm763, %v755, %v760
    %v765 = vrsqrt.pop %v721
    %v766 = vmul.f32 %v765, %v721
    %v767 = vmul.f32 %v766, %v765
    %v768 = vmul.f32 0.5, %v767
    %v769 = vsub.f32 1.5, %v768
    %v770 = vmul.f32 %v765, %v769
    %vm771 = vweird.f32 %v721
    %vm772 = vweird.f32 %v765
    %vm773 = vmor %vm771, %vm772
    %v774 = vsel %vm773, %v765, %v770
    %v775 = vrsqrt.pop %v722
    %v776 = vmul.f32 %v775, %v722
    %v777 = vmul.f32 %v776, %v775
    %v778 = vmul.f32 0.5, %v777
    %v779 = vsub.f32 1.5, %v778
    %v780 = vmul.f32 %v775, %v779
    %vm781 = vweird.f32 %v722
    %vm782 = vweird.f32 %v775
    %vm783 = vmor %vm781, %vm782
    %v784 = vsel %vm783, %v775, %v780
    %v785 = vrsqrt.pop %v723
    %v786 = vmul.f32 %v785, %v723
    %v787 = vmul.f32 %v786, %v785
    %v788 = vmul.f32 0.5, %v787
    %v789 = vsub.f32 1.5, %v788
    %v790 = vmul.f32 %v785, %v789
    %vm791 = vweird.f32 %v723
    %vm792 = vweird.f32 %v785
    %vm793 = vmor %vm791, %vm792
    %v794 = vsel %vm793, %v785, %v790
    %v795 = vrsqrt.pop %v724
    %v796 = vmul.f32 %v795, %v724
    %v797 = vmul.f32 %v796, %v795
    %v798 = vmul.f32 0.5, %v797
    %v799 = vsub.f32 1.5, %v798
    %v800 = vmul.f32 %v795, %v799
    %vm801 = vweird.f32 %v724
    %vm802 = vweird.f32 %v795
    %vm803 = vmor %vm801, %vm802
    %v804 = vsel %vm803, %v795, %v800
    %v805 = vmul.f32 %v306, %v306
    %v806 = vmul.f32 %v361, %v361
    %v807 = vmul.f32 %v416, %v416
    %v808 = vmul.f32 %v471, %v471
    %v809 = vmul.f32 %v526, %v526
    %v810 = vmul.f32 %v581, %v581
    %v811 = vmul.f32 %v636, %v636
    %v812 = vmul.f32 %v691, %v691
    %813 = vadd.xlane.f32.xlu0 %v805
    %v814 = vpop.xlane.xlu0 %813
    %815 = vadd.xlane.f32.xlu0 %v806
    %v816 = vpop.xlane.xlu0 %815
    %817 = vadd.xlane.f32.xlu0 %v807
    %v818 = vpop.xlane.xlu0 %817
    %819 = vadd.xlane.f32.xlu0 %v808
    %v820 = vpop.xlane.xlu0 %819
    %821 = vadd.xlane.f32.xlu0 %v809
    %v822 = vpop.xlane.xlu0 %821
    %823 = vadd.xlane.f32.xlu0 %v810
    %v824 = vpop.xlane.xlu0 %823
    %825 = vadd.xlane.f32.xlu0 %v811
    %v826 = vpop.xlane.xlu0 %825
    %827 = vadd.xlane.f32.xlu0 %v812
    %v828 = vpop.xlane.xlu0 %827
    %v829 = vmax.f32 %v814, 1e-16
    %v830 = vmax.f32 %v816, 1e-16
    %v831 = vmax.f32 %v818, 1e-16
    %v832 = vmax.f32 %v820, 1e-16
    %v833 = vmax.f32 %v822, 1e-16
    %v834 = vmax.f32 %v824, 1e-16
    %v835 = vmax.f32 %v826, 1e-16
    %v836 = vmax.f32 %v828, 1e-16
    %v837 = vrsqrt.pop %v829
    %v838 = vmul.f32 %v837, %v829
    %v839 = vmul.f32 %v838, %v837
    %v840 = vmul.f32 0.5, %v839
    %v841 = vsub.f32 1.5, %v840
    %v842 = vmul.f32 %v837, %v841
    %vm843 = vweird.f32 %v829
    %vm844 = vweird.f32 %v837
    %vm845 = vmor %vm843, %vm844
    %v846 = vsel %vm845, %v837, %v842
    %v847 = vrsqrt.pop %v830
    %v848 = vmul.f32 %v847, %v830
    %v849 = vmul.f32 %v848, %v847
    %v850 = vmul.f32 0.5, %v849
    %v851 = vsub.f32 1.5, %v850
    %v852 = vmul.f32 %v847, %v851
    %vm853 = vweird.f32 %v830
    %vm854 = vweird.f32 %v847
    %vm855 = vmor %vm853, %vm854
    %v856 = vsel %vm855, %v847, %v852
    %v857 = vrsqrt.pop %v831
    %v858 = vmul.f32 %v857, %v831
    %v859 = vmul.f32 %v858, %v857
    %v860 = vmul.f32 0.5, %v859
    %v861 = vsub.f32 1.5, %v860
    %v862 = vmul.f32 %v857, %v861
    %vm863 = vweird.f32 %v831
    %vm864 = vweird.f32 %v857
    %vm865 = vmor %vm863, %vm864
    %v866 = vsel %vm865, %v857, %v862
    %v867 = vrsqrt.pop %v832
    %v868 = vmul.f32 %v867, %v832
    %v869 = vmul.f32 %v868, %v867
    %v870 = vmul.f32 0.5, %v869
    %v871 = vsub.f32 1.5, %v870
    %v872 = vmul.f32 %v867, %v871
    %vm873 = vweird.f32 %v832
    %vm874 = vweird.f32 %v867
    %vm875 = vmor %vm873, %vm874
    %v876 = vsel %vm875, %v867, %v872
    %v877 = vrsqrt.pop %v833
    %v878 = vmul.f32 %v877, %v833
    %v879 = vmul.f32 %v878, %v877
    %v880 = vmul.f32 0.5, %v879
    %v881 = vsub.f32 1.5, %v880
    %v882 = vmul.f32 %v877, %v881
    %vm883 = vweird.f32 %v833
    %vm884 = vweird.f32 %v877
    %vm885 = vmor %vm883, %vm884
    %v886 = vsel %vm885, %v877, %v882
    %v887 = vrsqrt.pop %v834
    %v888 = vmul.f32 %v887, %v834
    %v889 = vmul.f32 %v888, %v887
    %v890 = vmul.f32 0.5, %v889
    %v891 = vsub.f32 1.5, %v890
    %v892 = vmul.f32 %v887, %v891
    %vm893 = vweird.f32 %v834
    %vm894 = vweird.f32 %v887
    %vm895 = vmor %vm893, %vm894
    %v896 = vsel %vm895, %v887, %v892
    %v897 = vrsqrt.pop %v835
    %v898 = vmul.f32 %v897, %v835
    %v899 = vmul.f32 %v898, %v897
    %v900 = vmul.f32 0.5, %v899
    %v901 = vsub.f32 1.5, %v900
    %v902 = vmul.f32 %v897, %v901
    %vm903 = vweird.f32 %v835
    %vm904 = vweird.f32 %v897
    %vm905 = vmor %vm903, %vm904
    %v906 = vsel %vm905, %v897, %v902
    %v907 = vrsqrt.pop %v836
    %v908 = vmul.f32 %v907, %v836
    %v909 = vmul.f32 %v908, %v907
    %v910 = vmul.f32 0.5, %v909
    %v911 = vsub.f32 1.5, %v910
    %v912 = vmul.f32 %v907, %v911
    %vm913 = vweird.f32 %v836
    %vm914 = vweird.f32 %v907
    %vm915 = vmor %vm913, %vm914
    %v916 = vsel %vm915, %v907, %v912
    %v917 = vmul.f32 %v132, %v734
    %v918 = vmul.f32 %v137, %v744
    %v919 = vmul.f32 %v142, %v754
    %v920 = vmul.f32 %v147, %v764
    %v921 = vmul.f32 %v152, %v774
    %v922 = vmul.f32 %v157, %v784
    %v923 = vmul.f32 %v162, %v794
    %v924 = vmul.f32 %v167, %v804
    %v925 = vmul.f32 %v306, %v846
    %v926 = vmul.f32 %v361, %v856
    %v927 = vmul.f32 %v416, %v866
    %v928 = vmul.f32 %v471, %v876
    %v929 = vmul.f32 %v526, %v886
    %v930 = vmul.f32 %v581, %v896
    %v931 = vmul.f32 %v636, %v906
    %v932 = vmul.f32 %v691, %v916
    %933 = vmatpush.xpose.msra.mxu0 0.0
    %934 = vmatpush.xpose.msra.mxu0 0.0
    %935 = vmatpush.xpose.msra.mxu0 0.0
    %936 = vmatpush.xpose.msra.mxu0 0.0
    %937 = vmatpush.xpose.msra.mxu0 0.0
    %938 = vmatpush.xpose.msra.mxu0 0.0
    %939 = vmatpush.xpose.msra.mxu0 0.0
    %940 = vmatpush.xpose.msra.mxu0 0.0
    %941 = vmatpush.xpose.msra.mxu0 0.0
    %942 = vmatpush.xpose.msra.mxu0 0.0
    %943 = vmatpush.xpose.msra.mxu0 0.0
    %944 = vmatpush.xpose.msra.mxu0 0.0
    %945 = vmatpush.xpose.msra.mxu0 0.0
    %946 = vmatpush.xpose.msra.mxu0 0.0
    %947 = vmatpush.xpose.msra.mxu0 0.0
    %948 = vmatpush.xpose.msra.mxu0 %v925
    %949 = vmatmul.f32.gmra.mxu0 %v917
    %v950 = vpop.f32.mrf.mxu0
    %v951 = vadd.f32 0.0, %v950
    %952 = vdwg.mxu0
    %953 = vmatpush.xpose.msra.mxu0 0.0
    %954 = vmatpush.xpose.msra.mxu0 0.0
    %955 = vmatpush.xpose.msra.mxu0 0.0
    %956 = vmatpush.xpose.msra.mxu0 0.0
    %957 = vmatpush.xpose.msra.mxu0 0.0
    %958 = vmatpush.xpose.msra.mxu0 0.0
    %959 = vmatpush.xpose.msra.mxu0 0.0
    %960 = vmatpush.xpose.msra.mxu0 0.0
    %961 = vmatpush.xpose.msra.mxu0 0.0
    %962 = vmatpush.xpose.msra.mxu0 0.0
    %963 = vmatpush.xpose.msra.mxu0 0.0
    %964 = vmatpush.xpose.msra.mxu0 0.0
    %965 = vmatpush.xpose.msra.mxu0 0.0
    %966 = vmatpush.xpose.msra.mxu0 0.0
    %967 = vmatpush.xpose.msra.mxu0 0.0
    %968 = vmatpush.xpose.msra.mxu0 %v926
    %969 = vmatmul.f32.gmra.mxu0 %v918
    %v970 = vpop.f32.mrf.mxu0
    %v971 = vadd.f32 0.0, %v970
    %972 = vdwg.mxu0
    %973 = vmatpush.xpose.msra.mxu0 0.0
    %974 = vmatpush.xpose.msra.mxu0 0.0
    %975 = vmatpush.xpose.msra.mxu0 0.0
    %976 = vmatpush.xpose.msra.mxu0 0.0
    %977 = vmatpush.xpose.msra.mxu0 0.0
    %978 = vmatpush.xpose.msra.mxu0 0.0
    %979 = vmatpush.xpose.msra.mxu0 0.0
    %980 = vmatpush.xpose.msra.mxu0 0.0
    %981 = vmatpush.xpose.msra.mxu0 0.0
    %982 = vmatpush.xpose.msra.mxu0 0.0
    %983 = vmatpush.xpose.msra.mxu0 0.0
    %984 = vmatpush.xpose.msra.mxu0 0.0
    %985 = vmatpush.xpose.msra.mxu0 0.0
    %986 = vmatpush.xpose.msra.mxu0 0.0
    %987 = vmatpush.xpose.msra.mxu0 0.0
    %988 = vmatpush.xpose.msra.mxu0 %v927
    %989 = vmatmul.f32.gmra.mxu0 %v919
    %v990 = vpop.f32.mrf.mxu0
    %v991 = vadd.f32 0.0, %v990
    %992 = vdwg.mxu0
    %993 = vmatpush.xpose.msra.mxu0 0.0
    %994 = vmatpush.xpose.msra.mxu0 0.0
    %995 = vmatpush.xpose.msra.mxu0 0.0
    %996 = vmatpush.xpose.msra.mxu0 0.0
    %997 = vmatpush.xpose.msra.mxu0 0.0
    %998 = vmatpush.xpose.msra.mxu0 0.0
    %999 = vmatpush.xpose.msra.mxu0 0.0
    %1000 = vmatpush.xpose.msra.mxu0 0.0
    %1001 = vmatpush.xpose.msra.mxu0 0.0
    %1002 = vmatpush.xpose.msra.mxu0 0.0
    %1003 = vmatpush.xpose.msra.mxu0 0.0
    %1004 = vmatpush.xpose.msra.mxu0 0.0
    %1005 = vmatpush.xpose.msra.mxu0 0.0
    %1006 = vmatpush.xpose.msra.mxu0 0.0
    %1007 = vmatpush.xpose.msra.mxu0 0.0
    %1008 = vmatpush.xpose.msra.mxu0 %v928
    %1009 = vmatmul.f32.gmra.mxu0 %v920
    %v1010 = vpop.f32.mrf.mxu0
    %v1011 = vadd.f32 0.0, %v1010
    %1012 = vdwg.mxu0
    %1013 = vmatpush.xpose.msra.mxu0 0.0
    %1014 = vmatpush.xpose.msra.mxu0 0.0
    %1015 = vmatpush.xpose.msra.mxu0 0.0
    %1016 = vmatpush.xpose.msra.mxu0 0.0
    %1017 = vmatpush.xpose.msra.mxu0 0.0
    %1018 = vmatpush.xpose.msra.mxu0 0.0
    %1019 = vmatpush.xpose.msra.mxu0 0.0
    %1020 = vmatpush.xpose.msra.mxu0 0.0
    %1021 = vmatpush.xpose.msra.mxu0 0.0
    %1022 = vmatpush.xpose.msra.mxu0 0.0
    %1023 = vmatpush.xpose.msra.mxu0 0.0
    %1024 = vmatpush.xpose.msra.mxu0 0.0
    %1025 = vmatpush.xpose.msra.mxu0 0.0
    %1026 = vmatpush.xpose.msra.mxu0 0.0
    %1027 = vmatpush.xpose.msra.mxu0 0.0
    %1028 = vmatpush.xpose.msra.mxu0 %v929
    %1029 = vmatmul.f32.gmra.mxu0 %v921
    %v1030 = vpop.f32.mrf.mxu0
    %v1031 = vadd.f32 0.0, %v1030
    %1032 = vdwg.mxu0
    %1033 = vmatpush.xpose.msra.mxu0 0.0
    %1034 = vmatpush.xpose.msra.mxu0 0.0
    %1035 = vmatpush.xpose.msra.mxu0 0.0
    %1036 = vmatpush.xpose.msra.mxu0 0.0
    %1037 = vmatpush.xpose.msra.mxu0 0.0
    %1038 = vmatpush.xpose.msra.mxu0 0.0
    %1039 = vmatpush.xpose.msra.mxu0 0.0
    %1040 = vmatpush.xpose.msra.mxu0 0.0
    %1041 = vmatpush.xpose.msra.mxu0 0.0
    %1042 = vmatpush.xpose.msra.mxu0 0.0
    %1043 = vmatpush.xpose.msra.mxu0 0.0
    %1044 = vmatpush.xpose.msra.mxu0 0.0
    %1045 = vmatpush.xpose.msra.mxu0 0.0
    %1046 = vmatpush.xpose.msra.mxu0 0.0
    %1047 = vmatpush.xpose.msra.mxu0 0.0
    %1048 = vmatpush.xpose.msra.mxu0 %v930
    %1049 = vmatmul.f32.gmra.mxu0 %v922
    %v1050 = vpop.f32.mrf.mxu0
    %v1051 = vadd.f32 0.0, %v1050
    %1052 = vdwg.mxu0
    %1053 = vmatpush.xpose.msra.mxu0 0.0
    %1054 = vmatpush.xpose.msra.mxu0 0.0
    %1055 = vmatpush.xpose.msra.mxu0 0.0
    %1056 = vmatpush.xpose.msra.mxu0 0.0
    %1057 = vmatpush.xpose.msra.mxu0 0.0
    %1058 = vmatpush.xpose.msra.mxu0 0.0
    %1059 = vmatpush.xpose.msra.mxu0 0.0
    %1060 = vmatpush.xpose.msra.mxu0 0.0
    %1061 = vmatpush.xpose.msra.mxu0 0.0
    %1062 = vmatpush.xpose.msra.mxu0 0.0
    %1063 = vmatpush.xpose.msra.mxu0 0.0
    %1064 = vmatpush.xpose.msra.mxu0 0.0
    %1065 = vmatpush.xpose.msra.mxu0 0.0
    %1066 = vmatpush.xpose.msra.mxu0 0.0
    %1067 = vmatpush.xpose.msra.mxu0 0.0
    %1068 = vmatpush.xpose.msra.mxu0 %v931
    %1069 = vmatmul.f32.gmra.mxu0 %v923
    %v1070 = vpop.f32.mrf.mxu0
    %v1071 = vadd.f32 0.0, %v1070
    %1072 = vdwg.mxu0
    %1073 = vmatpush.xpose.msra.mxu0 0.0
    %1074 = vmatpush.xpose.msra.mxu0 0.0
    %1075 = vmatpush.xpose.msra.mxu0 0.0
    %1076 = vmatpush.xpose.msra.mxu0 0.0
    %1077 = vmatpush.xpose.msra.mxu0 0.0
    %1078 = vmatpush.xpose.msra.mxu0 0.0
    %1079 = vmatpush.xpose.msra.mxu0 0.0
    %1080 = vmatpush.xpose.msra.mxu0 0.0
    %1081 = vmatpush.xpose.msra.mxu0 0.0
    %1082 = vmatpush.xpose.msra.mxu0 0.0
    %1083 = vmatpush.xpose.msra.mxu0 0.0
    %1084 = vmatpush.xpose.msra.mxu0 0.0
    %1085 = vmatpush.xpose.msra.mxu0 0.0
    %1086 = vmatpush.xpose.msra.mxu0 0.0
    %1087 = vmatpush.xpose.msra.mxu0 0.0
    %1088 = vmatpush.xpose.msra.mxu0 %v932
    %1089 = vmatmul.f32.gmra.mxu0 %v924
    %v1090 = vpop.f32.mrf.mxu0
    %v1091 = vadd.f32 0.0, %v1090
    %1092 = vdwg.mxu0
    %1093 = vst.msk [vmem:[#allocation2] sm:$0xff] %vm284, %v951
    %1094 = vst.msk [vmem:[#allocation2 + $0x8] sm:$0xff] %vm284, %v971
    %1095 = vst.msk [vmem:[#allocation2 + $0x10] sm:$0xff] %vm284, %v991
    %1096 = vst.msk [vmem:[#allocation2 + $0x18] sm:$0xff] %vm284, %v1011
    %1097 = vst.msk [vmem:[#allocation2 + $0x20] sm:$0xff] %vm284, %v1031
    %1098 = vst.msk [vmem:[#allocation2 + $0x28] sm:$0xff] %vm284, %v1051
    %1099 = vst.msk [vmem:[#allocation2 + $0x30] sm:$0xff] %vm284, %v1071
    %1100 = vst.msk [vmem:[#allocation2 + $0x38] sm:$0xff] %vm284, %v1091
    // Predicated region
    $region18: #{tpu_custom_call.1} parent=1 // pred_check
      _
    $region19: #{tpu_custom_call.1} parent=1 // pred_check_branch
      %1102 = sbr.rel (0) target = $region21
    $region20: #{tpu_custom_call.1} parent=1 // pred_region
      %1104 = vsyncadd [#allocation3], 0
      %s1105 = sshll.u32 [#allocation2], 4
      %s1106 = int_to_ptr.vmem [resolvable:$true] %s1105
      %s1107 = sshll.u32 %s4, 4
      %s1108 = int_to_ptr.hbm [resolvable:$true] %s1107
      %1113 = dma.vmem_to_hbm [thread:$0]  %s1106, 1024, %s1108, [#allocation3], 128, 128, 8
    $region21: #{tpu_custom_call.1} parent=1 // pred_fallthru
      _
    // Predicated region
    $region22: #{tpu_custom_call.1} parent=1 // pred_check
      _
    $region23: #{tpu_custom_call.1} parent=1 // pred_check_branch
      %1115 = sbr.rel (0) target = $region25
    $region24: #{tpu_custom_call.1} parent=1 // pred_region
      %1117 = dma.done [#allocation3], 1024
    $region25: #{tpu_custom_call.1} parent=1 // pred_fallthru
      _
    %1118 = vsyncpa [#allocation3], 1

</llo_original>
